<compile_context>
chip_gen: v6e
topology: v6e:2x2x1
jax: 0.10.0
libtpu: 0.0.40
codegen_flags: <defaults>
</compile_context>

<pallas_src>
import functools

import jax
import jax.numpy as jnp
from jax.experimental import pallas as pl
from jax.experimental.pallas import tpu as pltpu

_NEG_INF = -1e30
_LANES = 128


def _round_up(x: int, m: int) -> int:
    return ((x + m - 1) // m) * m


# ---------------------------------------------------------------------------
# Fast path: all keys (b2) resident in VMEM -> one plain row-wise logsumexp per
# query tile. Single grid axis, no online-softmax rescale, no scratch.
# ---------------------------------------------------------------------------
def _infonce_resident_kernel(b1_ref, b2_ref, out_ref, *, inv_t, n_real_k,
                             mask_keys):
    sim = jax.lax.dot_general(
        b1_ref[...], b2_ref[...],
        dimension_numbers=(((1,), (1,)), ((), ())),
        preferred_element_type=jnp.float32) * inv_t          # (tile_q, n_pad_k)
    if mask_keys:
        col = jax.lax.broadcasted_iota(jnp.int32, sim.shape, 1)
        sim = jnp.where(col < n_real_k, sim, _NEG_INF)
    m = jnp.max(sim, axis=1, keepdims=True)
    l = jnp.sum(jnp.exp(sim - m), axis=1, keepdims=True)
    out_ref[...] = jnp.broadcast_to(m + jnp.log(l), out_ref.shape)


# ---------------------------------------------------------------------------
# Streaming path: keys tiled over a reduction grid axis, flash-style online
# logsumexp accumulators in VMEM scratch.
# ---------------------------------------------------------------------------
def _infonce_stream_kernel(b1_ref, b2_ref, out_ref, m_sc, l_sc, *,
                           inv_t, tile_k, num_k_tiles, n_real_k, mask_keys):
    ki = pl.program_id(1)   # key tile (reduction axis, last, "arbitrary")

    @pl.when(ki == 0)
    def _init():
        m_sc[...] = jnp.full_like(m_sc, _NEG_INF)
        l_sc[...] = jnp.zeros_like(l_sc)

    sim = jax.lax.dot_general(
        b1_ref[...], b2_ref[...],
        dimension_numbers=(((1,), (1,)), ((), ())),
        preferred_element_type=jnp.float32) * inv_t          # (tile_q, tile_k)

    def _online_update(s):
        m_prev = m_sc[...]
        m_new = jnp.maximum(m_prev, jnp.max(s, axis=1, keepdims=True))
        l_sc[...] = (jnp.exp(m_prev - m_new) * l_sc[...]
                     + jnp.sum(jnp.exp(s - m_new), axis=1, keepdims=True))
        m_sc[...] = m_new

    if mask_keys:
        # Only the final key tile contains padded key columns: gate the mask.
        last = num_k_tiles - 1
        valid_in_last = n_real_k - last * tile_k              # static int >= 1

        @pl.when(ki == last)
        def _masked():
            col = jax.lax.broadcasted_iota(jnp.int32, sim.shape, 1)
            _online_update(jnp.where(col < valid_in_last, sim, _NEG_INF))

        @pl.when(ki != last)
        def _unmasked():
            _online_update(sim)
    else:
        _online_update(sim)

    @pl.when(ki == num_k_tiles - 1)
    def _finalize():
        # Lane-dense, unmasked store; the wrapper reads column 0.
        out_ref[...] = jnp.broadcast_to(m_sc[...] + jnp.log(l_sc[...]),
                                        out_ref.shape)


def infonce_loss(batch1, batch2, temperature: float = 0.07, *,
                 tile_q: int = 512, tile_k: int = 512,
                 keys_resident_bytes: int = 12 * 1024 * 1024,
                 vmem_target_bytes: int = 40 * 1024 * 1024):
    assert batch1.shape[0] == batch2.shape[0], (
        "The two batches must have the same number of samples")
    n, d = batch1.shape
    assert batch2.shape == (n, d)

    inv_t = float(1.0 / temperature)
    itemsize = jnp.dtype(batch1.dtype).itemsize
    d_pad = max(_LANES, _round_up(d, _LANES))

    # Exact positive-pair logits in one fused O(N*D) XLA pass; subtracted from
    # the per-row logsumexp below.
    diag = jnp.sum(batch1.astype(jnp.float32) * batch2.astype(jnp.float32),
                   axis=-1) * inv_t

    # ---- tile selection -----------------------------------------------------
    tile_q = max(8, (min(tile_q, _round_up(n, 8)) // 8) * 8)

    n_keys8 = _round_up(n, 8)
    resident = n_keys8 * d_pad * itemsize <= keys_resident_bytes
    if resident:
        tile_k = n_keys8
    else:
        tile_k = max(_LANES,
                     (min(tile_k, _round_up(n, _LANES)) // _LANES) * _LANES)

    def _vmem_bytes(tq, tk):
        return (2 * (tq + tk) * d_pad * itemsize      # double-buffered inputs
                + 2 * tq * _LANES * 4                 # double-buffered output
                + tq * tk * 4                         # sim tile
                + 8 * tq * 4)                         # accumulators + slack

    # v7x has only 64 MiB physical VMEM per core: shrink until we fit target.
    while _vmem_bytes(tile_q, tile_k) > vmem_target_bytes and tile_q > 64:
        tile_q = max(8, ((tile_q // 2) // 8) * 8)
    while (not resident and _vmem_bytes(tile_q, tile_k) > vmem_target_bytes
           and tile_k > _LANES):
        tile_k = max(_LANES, ((tile_k // 2) // _LANES) * _LANES)

    n_pad_q = _round_up(n, tile_q)
    n_pad_k = _round_up(n, tile_k)
    num_q_tiles = n_pad_q // tile_q
    num_k_tiles = n_pad_k // tile_k
    mask_keys = (n_pad_k != n)

    # ---- pad only when needed (no wrapper-side temperature scaling) ---------
    b1p = (batch1 if (n_pad_q == n and d_pad == d)
           else jnp.pad(batch1, ((0, n_pad_q - n), (0, d_pad - d))))
    b2p = (batch2 if (n_pad_k == n and d_pad == d)
           else jnp.pad(batch2, ((0, n_pad_k - n), (0, d_pad - d))))

    if resident:
        kernel = functools.partial(
            _infonce_resident_kernel, inv_t=inv_t, n_real_k=n,
            mask_keys=mask_keys)
        grid_spec = pltpu.PrefetchScalarGridSpec(
            num_scalar_prefetch=0,
            grid=(num_q_tiles,),
            in_specs=[
                pl.BlockSpec((tile_q, d_pad), lambda qi: (qi, 0)),
                pl.BlockSpec((n_pad_k, d_pad), lambda qi: (0, 0)),  # keys resident
            ],
            out_specs=pl.BlockSpec((tile_q, _LANES), lambda qi: (qi, 0)))
        dims = ("parallel",)
        b2_reads = 1
    else:
        kernel = functools.partial(
            _infonce_stream_kernel, inv_t=inv_t, tile_k=tile_k,
            num_k_tiles=num_k_tiles, n_real_k=n, mask_keys=mask_keys)
        grid_spec = pltpu.PrefetchScalarGridSpec(
            num_scalar_prefetch=0,
            grid=(num_q_tiles, num_k_tiles),
            in_specs=[
                pl.BlockSpec((tile_q, d_pad), lambda qi, ki: (qi, 0)),
                pl.BlockSpec((tile_k, d_pad), lambda qi, ki: (ki, 0)),
            ],
            out_specs=pl.BlockSpec((tile_q, _LANES), lambda qi, ki: (qi, 0)),
            scratch_shapes=[pltpu.VMEM((tile_q, 1), jnp.float32),   # running max
                            pltpu.VMEM((tile_q, 1), jnp.float32)])  # running sum
        dims = ("parallel", "arbitrary")
        b2_reads = num_q_tiles

    cost = pl.CostEstimate(
        flops=2 * n_pad_q * n_pad_k * d_pad,
        transcendentals=n_pad_q * n_pad_k,
        bytes_accessed=(n_pad_q * d_pad * itemsize
                        + b2_reads * n_pad_k * d_pad * itemsize
                        + n_pad_q * _LANES * 4))

    vmem_limit = int(min(64 * 1024 * 1024,
                         max(32 * 1024 * 1024,
                             2 * _vmem_bytes(tile_q, tile_k))))

    lse = pl.pallas_call(
        kernel,
        out_shape=jax.ShapeDtypeStruct((n_pad_q, _LANES), jnp.float32),
        grid_spec=grid_spec,
        compiler_params=pltpu.CompilerParams(
            dimension_semantics=dims, vmem_limit_bytes=vmem_limit),
        cost_estimate=cost,
    )(b1p, b2p)

    # Final mean over the real (un-padded) rows in the wrapper.
    return jnp.mean(lse[:n, 0] - diag)


def infonce_loss_ref(batch1, batch2, temperature: float = 0.07):
    sim = jnp.matmul(batch1.astype(jnp.float32),
                     batch2.astype(jnp.float32).T,
                     precision=jax.lax.Precision.HIGHEST) / temperature
    return jnp.mean(-jnp.diagonal(sim) + jax.nn.logsumexp(sim, axis=1))


if __name__ == "__main__":
    key = jax.random.PRNGKey(0)
    k1, k2, k3, k4, k5, k6 = jax.random.split(key, 6)

    # 1) Tiny shape (keys-resident fast path).
    a1 = jax.random.normal(k1, (8, 32), dtype=jnp.float32)
    b1 = jax.random.normal(k2, (8, 32), dtype=jnp.float32)
    out1 = jax.block_until_ready(infonce_loss(a1, b1, temperature=0.07))
    ref1 = infonce_loss_ref(a1, b1, temperature=0.07)
    assert jnp.allclose(out1, ref1, atol=2e-3, rtol=2e-3), (out1, ref1)

    # 2) Non-aligned N/D, still keys-resident.
    a2 = jax.random.normal(k3, (200, 96), dtype=jnp.float32)
    b2 = jax.random.normal(k4, (200, 96), dtype=jnp.float32)
    out2 = jax.block_until_ready(infonce_loss(a2, b2, temperature=0.07))
    ref2 = infonce_loss_ref(a2, b2, temperature=0.07)
    assert jnp.allclose(out2, ref2, atol=2e-3, rtol=2e-3), (out2, ref2)

    # 3) Force the streaming (flash) path: multi-tile grid + last-key-tile mask.
    out3 = jax.block_until_ready(
        infonce_loss(a2, b2, temperature=0.07,
                     tile_q=128, tile_k=128, keys_resident_bytes=0))
    assert jnp.allclose(out3, ref2, atol=2e-3, rtol=2e-3), (out3, ref2)

    # 4) Ragged tiny N exercising the resident-path key mask.
    a3 = jax.random.normal(k5, (5, 32), dtype=jnp.float32)
    b3 = jax.random.normal(k6, (5, 32), dtype=jnp.float32)
    out4 = jax.block_until_ready(infonce_loss(a3, b3, temperature=0.07))
    ref4 = infonce_loss_ref(a3, b3, temperature=0.07)
    assert jnp.allclose(out4, ref4, atol=2e-3, rtol=2e-3), (out4, ref4)

    print("KERNEL_OK")
</pallas_src>

<mosaic_0001>
module attributes {stable_mosaic.version = 11 : i64} {
  func.func @_infonce_resident_kernel(%arg0: i32, %arg1: memref<8x128xf32, #tpu.memory_space<vmem>>, %arg2: memref<8x128xf32, #tpu.memory_space<vmem>>, %arg3: memref<8x128xf32, #tpu.memory_space<vmem>>) attributes {dimension_semantics = [#tpu.dimension_semantics<parallel>], iteration_bounds = array<i64: 1>, scalar_prefetch = 0 : i64, scratch_operands = 0 : i64, tpu.core_type = #tpu.core_type<tc>, window_params = [{transform_indices = @transform_0, window_bounds = array<i64: 8, 128>}, {pipeline_mode = #tpu.pipeline_mode<synchronous>, transform_indices = @transform_1, window_bounds = array<i64: 8, 128>}, {transform_indices = @transform_2, window_bounds = array<i64: 8, 128>}]} {
    %c0 = arith.constant 0 : index
    %c0_0 = arith.constant 0 : index
    %0 = vector.load %arg1[%c0, %c0_0] : memref<8x128xf32, #tpu.memory_space<vmem>>, vector<8x128xf32>
    %c0_1 = arith.constant 0 : index
    %c0_2 = arith.constant 0 : index
    %1 = vector.load %arg2[%c0_1, %c0_2] : memref<8x128xf32, #tpu.memory_space<vmem>>, vector<8x128xf32>
    %cst = arith.constant dense<0.000000e+00> : vector<8x8xf32>
    %2 = tpu.matmul %0, %1, %cst {dimension_numbers = #tpu.dot_dimension_numbers<[1], [1], [0], [0], [0, 0, 1, 0], [], []>} : vector<8x128xf32>, vector<8x128xf32>, vector<8x8xf32> -> vector<8x8xf32>
    %cst_3 = arith.constant 14.2857141 : f32
    %3 = vector.broadcast %cst_3 : f32 to vector<8x8xf32>
    %4 = arith.mulf %2, %3 : vector<8x8xf32>
    %cst_4 = arith.constant dense<0xFF800000> : vector<8xf32>
    %5 = vector.multi_reduction <maximumf>, %4, %cst_4 [1] : vector<8x8xf32> to vector<8xf32>
    %6 = vector.shape_cast %5 : vector<8xf32> to vector<8x1xf32>
    %7 = vector.broadcast %6 : vector<8x1xf32> to vector<8x8xf32>
    %8 = arith.subf %4, %7 : vector<8x8xf32>
    %9 = math.exp %8 : vector<8x8xf32>
    %cst_5 = arith.constant dense<0.000000e+00> : vector<8xf32>
    %10 = vector.multi_reduction <add>, %9, %cst_5 [1] : vector<8x8xf32> to vector<8xf32>
    %11 = vector.shape_cast %10 : vector<8xf32> to vector<8x1xf32>
    %12 = math.log %11 : vector<8x1xf32>
    %13 = arith.addf %6, %12 : vector<8x1xf32>
    %14 = vector.shape_cast %13 : vector<8x1xf32> to vector<8x1xf32>
    %15 = vector.broadcast %14 : vector<8x1xf32> to vector<8x128xf32>
    %c0_6 = arith.constant 0 : index
    %c0_7 = arith.constant 0 : index
    %16 = vector.load %arg3[%c0_6, %c0_7] : memref<8x128xf32, #tpu.memory_space<vmem>>, vector<8x128xf32>
    tpu.vector_store %arg3[%c0_6, %c0_7], %15 {strides = array<i32>} : memref<8x128xf32, #tpu.memory_space<vmem>>, vector<8x128xf32>,
    return
  }
  func.func @transform_0(%arg0: i32) -> (i32, i32) {
    %c0_i32 = arith.constant 0 : i32
    %c0_i32_0 = arith.constant 0 : i32
    return %arg0, %c0_i32 : i32, i32
  }
  func.func @transform_1(%arg0: i32) -> (i32, i32) {
    %c0_i32 = arith.constant 0 : i32
    %c0_i32_0 = arith.constant 0 : i32
    %c0_i32_1 = arith.constant 0 : i32
    return %c0_i32, %c0_i32_0 : i32, i32
  }
  func.func @transform_2(%arg0: i32) -> (i32, i32) {
    %c0_i32 = arith.constant 0 : i32
    %c0_i32_0 = arith.constant 0 : i32
    return %arg0, %c0_i32 : i32, i32
  }
}

</mosaic_0001>

<llo_original>
// kernel: tpu_custom_call.1
$region0: #{tpu_custom_call.1}
  #allocation0 [shape = 'u32[]', space=smem, size = 0x4, offset = 0x4, fixed_abs, tag = 'smem constant byte address 0x4 - core index']
  #allocation1 [shape = 'u32[144,128]{1,0:T(1,128)}', space=vmem, size = 0x12000, scoped, tag = 'internal scratch']
  %s0 = inlined_call_operand.hbm [shape: f32[8,128], index: 0, kind: input, shape index: {}]
  %s1 = inlined_call_operand.hbm [shape: f32[8,128], index: 1, kind: input, shape index: {}]
  %s2 = inlined_call_operand.hbm [shape: f32[8,128], index: 2, kind: output, shape index: {}]
  %s3 = sld [smem:[#allocation0]]
  $region26: #{tpu_custom_call.1} parent=0
    _
  %s5 = ssub.s32 1, %s3
  %s6 = scalar_select 0, %s5, %s3
  $region1: #{tpu_custom_call.1} parent=0
    #allocation2 [shape = 'u8[4096]{0}', space=vmem, size = 0x1000, scoped, tag = 'input window, operand 0, single buffered']
    #allocation3 [shape = 's32[1]{0}', space=sflag, size = 0x4, scoped, tag = 'scoped memory for tpu_custom_call.1']
    #allocation4 [shape = 's32[1]{0}', space=sflag, size = 0x4, scoped, tag = 'scoped memory for tpu_custom_call.1']
    #allocation5 [shape = 'u8[4096]{0}', space=vmem, size = 0x1000, scoped, tag = 'input window, operand 1, single buffered']
    #allocation6 [shape = 's32[1]{0}', space=sflag, size = 0x4, scoped, tag = 'scoped memory for tpu_custom_call.1']
    #allocation7 [shape = 'u8[4096]{0}', space=vmem, size = 0x1000, scoped, tag = 'output window, operand 0, single buffered']
    %7 = vsyncpa [#allocation3], 0
    %8 = vsyncpa [#allocation6], 0
    %9 = vsyncpa [#allocation4], 0
    // Predicated region
    $region2: #{tpu_custom_call.1} parent=1 // pred_check
      _
    $region3: #{tpu_custom_call.1} parent=1 // pred_check_branch
      %11 = sbr.rel (0) target = $region5
    $region4: #{tpu_custom_call.1} parent=1 // pred_region
      %s13 = ssub.s32 128, 128
      %14 = vsyncadd [#allocation3], %s13
      %s16 = sshll.u32 [#allocation2], 4
      %s17 = int_to_ptr.vmem [resolvable:$true] %s16
      %19 = dma.hbm_to_vmem [thread:$0]  %s0, 128, %s17, [#allocation3]
    $region5: #{tpu_custom_call.1} parent=1 // pred_fallthru
      _
    // Predicated region
    $region6: #{tpu_custom_call.1} parent=1 // pred_check
      _
    $region7: #{tpu_custom_call.1} parent=1 // pred_check_branch
      %21 = sbr.rel (0) target = $region9
    $region8: #{tpu_custom_call.1} parent=1 // pred_region
      %s23 = ssub.s32 128, 128
      %24 = vsyncadd [#allocation6], %s23
      %s26 = sshll.u32 [#allocation5], 4
      %s27 = int_to_ptr.vmem [resolvable:$true] %s26
      %29 = dma.hbm_to_vmem [thread:$0]  %s1, 128, %s27, [#allocation6]
    $region9: #{tpu_custom_call.1} parent=1 // pred_fallthru
      _
    // Predicated region
    $region10: #{tpu_custom_call.1} parent=1 // pred_check
      _
    $region11: #{tpu_custom_call.1} parent=1 // pred_check_branch
      %31 = sbr.rel (0) target = $region13
    $region12: #{tpu_custom_call.1} parent=1 // pred_region
      %32 = dma.done [#allocation3], 128
    $region13: #{tpu_custom_call.1} parent=1 // pred_fallthru
      _
    // Predicated region
    $region14: #{tpu_custom_call.1} parent=1 // pred_check
      _
    $region15: #{tpu_custom_call.1} parent=1 // pred_check_branch
      %34 = sbr.rel (0) target = $region17
    $region16: #{tpu_custom_call.1} parent=1 // pred_region
      %35 = dma.done [#allocation6], 128
    $region17: #{tpu_custom_call.1} parent=1 // pred_fallthru
      _
    %v36 = vld [vmem:[#allocation2] sm:$0xff]
    %v37 = vld [vmem:[#allocation5] sm:$0xff]
    %38 = vmatprep.subr.mxu0 0.0
    %39 = vmatpush1.xpose.msra.mxu0 0.0
    %40 = vmatprep.subr.mxu0 0.0
    %41 = vmatpush1.xpose.msra.mxu0 0.0
    %42 = vmatprep.subr.mxu0 0.0
    %43 = vmatpush1.xpose.msra.mxu0 0.0
    %44 = vmatprep.subr.mxu0 0.0
    %45 = vmatpush1.xpose.msra.mxu0 0.0
    %46 = vmatprep.subr.mxu0 0.0
    %47 = vmatpush1.xpose.msra.mxu0 0.0
    %48 = vmatprep.subr.mxu0 0.0
    %49 = vmatpush1.xpose.msra.mxu0 0.0
    %50 = vmatprep.subr.mxu0 0.0
    %51 = vmatpush1.xpose.msra.mxu0 0.0
    %52 = vmatprep.subr.mxu0 0.0
    %53 = vmatpush1.xpose.msra.mxu0 0.0
    %54 = vmatprep.subr.mxu0 0.0
    %55 = vmatpush1.xpose.msra.mxu0 0.0
    %56 = vmatprep.subr.mxu0 0.0
    %57 = vmatpush1.xpose.msra.mxu0 0.0
    %58 = vmatprep.subr.mxu0 0.0
    %59 = vmatpush1.xpose.msra.mxu0 0.0
    %60 = vmatprep.subr.mxu0 0.0
    %61 = vmatpush1.xpose.msra.mxu0 0.0
    %62 = vmatprep.subr.mxu0 0.0
    %63 = vmatpush1.xpose.msra.mxu0 0.0
    %64 = vmatprep.subr.mxu0 0.0
    %65 = vmatpush1.xpose.msra.mxu0 0.0
    %66 = vmatprep.subr.mxu0 0.0
    %67 = vmatpush1.xpose.msra.mxu0 0.0
    %68 = vmatprep.subr.mxu0 0.0
    %69 = vmatpush1.xpose.msra.mxu0 %v37
    %70 = vmatprep.subr.mxu0 0.0
    %71 = vmatpush2.xpose.msra.mxu0 0.0
    %72 = vmatprep.subr.mxu0 0.0
    %73 = vmatpush2.xpose.msra.mxu0 0.0
    %74 = vmatprep.subr.mxu0 0.0
    %75 = vmatpush2.xpose.msra.mxu0 0.0
    %76 = vmatprep.subr.mxu0 0.0
    %77 = vmatpush2.xpose.msra.mxu0 0.0
    %78 = vmatprep.subr.mxu0 0.0
    %79 = vmatpush2.xpose.msra.mxu0 0.0
    %80 = vmatprep.subr.mxu0 0.0
    %81 = vmatpush2.xpose.msra.mxu0 0.0
    %82 = vmatprep.subr.mxu0 0.0
    %83 = vmatpush2.xpose.msra.mxu0 0.0
    %84 = vmatprep.subr.mxu0 0.0
    %85 = vmatpush2.xpose.msra.mxu0 0.0
    %86 = vmatprep.subr.mxu0 0.0
    %87 = vmatpush2.xpose.msra.mxu0 0.0
    %88 = vmatprep.subr.mxu0 0.0
    %89 = vmatpush2.xpose.msra.mxu0 0.0
    %90 = vmatprep.subr.mxu0 0.0
    %91 = vmatpush2.xpose.msra.mxu0 0.0
    %92 = vmatprep.subr.mxu0 0.0
    %93 = vmatpush2.xpose.msra.mxu0 0.0
    %94 = vmatprep.subr.mxu0 0.0
    %95 = vmatpush2.xpose.msra.mxu0 0.0
    %96 = vmatprep.subr.mxu0 0.0
    %97 = vmatpush2.xpose.msra.mxu0 0.0
    %98 = vmatprep.subr.mxu0 0.0
    %99 = vmatpush2.xpose.msra.mxu0 0.0
    %100 = vmatprep.subr.mxu0 0.0
    %101 = vmatpush2.xpose.msra.mxu0 0.0
    %102 = vmatprep.mubr.f32.mxu0 0.0
    %103 = vmatmul.mubr.f32.gmra.mxu0 %v36
    %v104 = vpop.f32.mrf.mxu0
    %v105 = vadd.f32 0.0, %v104
    %v106 = vpop.f32.mrf.mxu0
    %107 = vdwg.mxu0
    %v108 = vmul.f32 %v105, 14.285714
    %vm109 = vcmask 64512
    %v110 = vsel %vm109, %v108, -inf
    %111 = vmax.xlane.f32.xlu0 %v110
    %v112 = vpop.xlane.xlu0 %111
    %v113 = vsub.f32 %v108, %v112
    %v114 = vmul.f32 %v113, 1.442695
    %v115 = vpow.pop %v114
    %v116 = vsel %vm109, %v115, 0.0
    %117 = vadd.xlane.f32.xlu0 %v116
    %v118 = vpop.xlane.xlu0 %117
    %v119 = vlog2.pop %v118
    %v120 = vmul.f32 %v119, 0.6931472
    %v121 = vadd.f32 %v112, %v120
    %122 = vst [vmem:[#allocation7] sm:$0xff] %v121
    // Predicated region
    $region18: #{tpu_custom_call.1} parent=1 // pred_check
      _
    $region19: #{tpu_custom_call.1} parent=1 // pred_check_branch
      %124 = sbr.rel (0) target = $region21
    $region20: #{tpu_custom_call.1} parent=1 // pred_region
      %s126 = ssub.s32 128, 128
      %127 = vsyncadd [#allocation4], %s126
      %s129 = sshll.u32 [#allocation7], 4
      %s130 = int_to_ptr.vmem [resolvable:$true] %s129
      %132 = dma.vmem_to_hbm [thread:$0]  %s130, 128, %s2, [#allocation4]
    $region21: #{tpu_custom_call.1} parent=1 // pred_fallthru
      _
    // Predicated region
    $region22: #{tpu_custom_call.1} parent=1 // pred_check
      _
    $region23: #{tpu_custom_call.1} parent=1 // pred_check_branch
      %134 = sbr.rel (0) target = $region25
    $region24: #{tpu_custom_call.1} parent=1 // pred_region
      %135 = dma.done [#allocation4], 128
    $region25: #{tpu_custom_call.1} parent=1 // pred_fallthru
      _
    %136 = vsyncpa [#allocation3], 1
    %137 = vsyncpa [#allocation6], 1
    %138 = vsyncpa [#allocation4], 1

</llo_original>
